<compile_context>
chip_gen: v5e
topology: v5e:2x2
jax: 0.10.0
libtpu: 0.0.40
codegen_flags: <defaults>
</compile_context>

<pallas_src>
import functools

import numpy as np
import jax
import jax.numpy as jnp
from jax.experimental import pallas as pl
from jax.experimental.pallas import tpu as pltpu

P_DROPOUT = 0.5
KEEP_PROB = 1.0 - P_DROPOUT
TOKEN_TILE = 1024          # rows per grid step (multiple of 8)
LANE = 128                 # lane width: pad weight out-dims to multiples of this

# Dropout keep thresholds (plain Python ints -> jaxpr literals, never captured consts).
_KEEP_THRESH32 = int(KEEP_PROB * (1 << 32))   # HW-PRNG path: uniform u32 < thresh
_KEEP_THRESH24 = int(KEEP_PROB * (1 << 24))   # hash path: top-24 bits < thresh

# Stateless-hash constants (interpret/CPU fallback path only).
_S_MULT = 0x27D4EB2F
_R_MULT = 0x9E3779B1
_C_MULT = 0x85EBCA77


def _round_up(x, m):
    return (x + m - 1) // m * m


def _mix32(x):
    """lowbias32-style avalanche on uint32 (plain VPU integer ops)."""
    x = x ^ (x >> 16)
    x = x * np.uint32(0x7FEB352D)
    x = x ^ (x >> 15)
    x = x * np.uint32(0x846CA68B)
    x = x ^ (x >> 16)
    return x


def _make_prenet_kernel(n_layers, out_pad, use_hw_prng):
    """Fused n_layers x (linear + relu + dropout) on one token tile."""

    def kernel(seeds_ref, x_ref, *rest):
        # rest = (w_0, b_0, w_1, b_1, ..., o_ref)
        o_ref = rest[-1]
        tile_rows = x_ref.shape[0]

        if use_hw_prng:
            # One seeding per (tile, seed); successive draws give per-layer masks.
            pltpu.prng_seed(seeds_ref[0], pl.program_id(0))
        else:
            # Layer-invariant part of the stateless hash, hoisted out of the loop.
            row0 = (pl.program_id(0) * tile_rows).astype(jnp.uint32)
            rows = jax.lax.broadcasted_iota(jnp.uint32, (tile_rows, out_pad), 0) + row0
            cols = jax.lax.broadcasted_iota(jnp.uint32, (tile_rows, out_pad), 1)
            hash_base = rows * np.uint32(_R_MULT) + cols * np.uint32(_C_MULT)

        h = x_ref[...]                                    # bf16 activations
        for l in range(n_layers):
            w_ref = rest[2 * l]                           # bf16 (in_pad, out_pad), 2x folded
            b_ref = rest[2 * l + 1]                       # f32  (1, out_pad),      2x folded
            y = jnp.dot(h, w_ref[...], preferred_element_type=jnp.float32)
            y = jnp.maximum(y + b_ref[...], 0.0)          # bias + ReLU (f32 epilogue)

            if use_hw_prng:
                bits = pltpu.prng_random_bits(y.shape)
                if bits.dtype != np.dtype("uint32"):
                    bits = pltpu.bitcast(bits, jnp.uint32)
                keep = bits < np.uint32(_KEEP_THRESH32)
            else:
                bits = _mix32(hash_base
                              + seeds_ref[l].astype(jnp.uint32) * np.uint32(_S_MULT))
                keep = (bits >> 8) < np.uint32(_KEEP_THRESH24)

            y = jnp.where(keep, y, 0.0)                   # 1/(1-p) already folded into W, b
            if l < n_layers - 1:
                h = y.astype(jnp.bfloat16)                # bf16 feed into next MXU matmul
            else:
                o_ref[...] = y.astype(o_ref.dtype)

    return kernel


def init_prenet_params(key, input_dim, prenet_dim, n_layers=2):
    """nn.Linear-style init (uniform +-1/sqrt(fan_in)); weights stored as (in, out)."""
    dims = [input_dim] + [prenet_dim] * n_layers
    params = []
    for l in range(n_layers):
        key, kw, kb = jax.random.split(key, 3)
        fan_in, fan_out = dims[l], dims[l + 1]
        bound = 1.0 / float(np.sqrt(fan_in))
        w = jax.random.uniform(kw, (fan_in, fan_out), jnp.float32, -bound, bound)
        b = jax.random.uniform(kb, (fan_out,), jnp.float32, -bound, bound)
        params.append((w, b))
    return params


def prepare_prenet_params(params):
    """One-time parameter prep (do OUTSIDE the per-step forward):
    pad out-dims to 128 lanes, fold the 1/(1-p)=2 inverted-dropout scale into
    W and b (exact: power of two), cast W to bf16.  Layer-0 in-dim stays unpadded."""
    scale = 1.0 / KEEP_PROB
    prepared = []
    prev_out_pad = None
    for l, (w, b) in enumerate(params):
        din, dout = w.shape
        dout_pad = _round_up(dout, LANE)
        din_pad = din if l == 0 else prev_out_pad
        wp = jnp.pad(w * scale, ((0, din_pad - din), (0, dout_pad - dout)))
        bp = jnp.pad(b * scale, (0, dout_pad - dout)).reshape(1, dout_pad)
        prepared.append((wp.astype(jnp.bfloat16), bp.astype(jnp.float32)))
        prev_out_pad = dout_pad
    return prepared


def prenet_forward(x, layers, base_seed, *, out_dim, use_hw_prng=True):
    """x: (B, T, input_dim) f32 -> (B, T, out_dim) f32.  Dropout always on.

    `layers` must come from prepare_prenet_params.  `out_dim` / `use_hw_prng`
    are static Python values (bind with functools.partial before jit)."""
    B, T, D = x.shape
    n_layers = len(layers)
    out_pads = [w.shape[1] for w, _ in layers]
    out_pad = out_pads[-1]
    assert all(p == out_pad for p in out_pads), "Prenet layers share prenet_dim"

    # ---- token tiling: big tiles, balanced even tile count when N is large ----
    N = B * T
    n_tiles = max(1, pl.cdiv(N, TOKEN_TILE))
    if n_tiles > 1 and n_tiles % 2 == 1:
        n_tiles += 1                      # even #tiles -> balanced across 2 TCs (v7x)
    tn = _round_up(pl.cdiv(N, n_tiles), 8)
    n_pad = tn * n_tiles

    # bf16 input; token-axis padding only (feature dim left at full D: block == array dim).
    x2d = x.reshape(N, D).astype(jnp.bfloat16)
    if n_pad != N:
        x2d = jnp.pad(x2d, ((0, n_pad - N), (0, 0)))

    in_specs = [pl.BlockSpec((tn, D), lambda i, s: (i, 0))]
    flat = [x2d]
    for w, b in layers:
        din_p, dout_p = w.shape
        # Constant index maps: weights/biases stay resident in VMEM across tiles.
        in_specs += [pl.BlockSpec((din_p, dout_p), lambda i, s: (0, 0)),
                     pl.BlockSpec((1, dout_p), lambda i, s: (0, 0))]
        flat += [w, b]

    # Per-layer seeds strided by n_layers so successive base seeds never alias
    # layer-l masks of step t+1 with layer-(l+1) masks of step t.
    seeds = (jnp.asarray(base_seed, jnp.int32) * n_layers
             + jnp.arange(n_layers, dtype=jnp.int32))

    flops = 2 * n_pad * sum(w.shape[0] * w.shape[1] for w, _ in layers)
    bytes_accessed = (x2d.size * 2 + n_pad * out_pad * 4
                      + sum(w.size * 2 + b.size * 4 for w, b in layers))

    grid_spec = pltpu.PrefetchScalarGridSpec(
        num_scalar_prefetch=1,
        grid=(n_tiles,),
        in_specs=in_specs,
        out_specs=pl.BlockSpec((tn, out_pad), lambda i, s: (i, 0)),
    )

    out = pl.pallas_call(
        _make_prenet_kernel(n_layers, out_pad, use_hw_prng),
        out_shape=jax.ShapeDtypeStruct((n_pad, out_pad), jnp.float32),
        grid_spec=grid_spec,
        compiler_params=pltpu.CompilerParams(
            dimension_semantics=("parallel",),       # shard token tiles across TCs
            vmem_limit_bytes=32 * 1024 * 1024,       # modest; v7x only has 64 MiB total
        ),
        cost_estimate=pl.CostEstimate(flops=flops, transcendentals=0,
                                      bytes_accessed=bytes_accessed),
    )(seeds, *flat)

    return out[:N, :out_dim].reshape(B, T, out_dim)


def prenet_reference_hash(x, layers, seeds, out_dim):
    """Pure-JAX replica of the kernel's hash-dropout fallback path (validation)."""
    B, T, D = x.shape
    N = B * T
    h = x.reshape(N, D).astype(jnp.bfloat16)
    y = None
    for l, (w, b) in enumerate(layers):
        y = jnp.dot(h, w, preferred_element_type=jnp.float32)
        y = jnp.maximum(y + b, 0.0)
        rows = jax.lax.broadcasted_iota(jnp.uint32, y.shape, 0)
        cols = jax.lax.broadcasted_iota(jnp.uint32, y.shape, 1)
        bits = _mix32(rows * np.uint32(_R_MULT) + cols * np.uint32(_C_MULT)
                      + seeds[l].astype(jnp.uint32) * np.uint32(_S_MULT))
        keep = (bits >> 8) < np.uint32(_KEEP_THRESH24)
        y = jnp.where(keep, y, 0.0)
        h = y.astype(jnp.bfloat16)
    return y[:, :out_dim].reshape(B, T, out_dim)


def _hw_prng_supported():
    """Probe whether the stateful TPU PRNG lowers in the current execution mode
    (real Mosaic: yes; interpret/CPU emulation: historically no)."""
    def probe(o_ref):
        pltpu.prng_seed(0)
        bits = pltpu.prng_random_bits(o_ref.shape)
        if bits.dtype != np.dtype("uint32"):
            bits = pltpu.bitcast(bits, jnp.uint32)
        o_ref[...] = bits

    try:
        out = pl.pallas_call(
            probe, out_shape=jax.ShapeDtypeStruct((8, 128), jnp.uint32))()
        jax.block_until_ready(out)
        return True
    except Exception:
        return False


if __name__ == "__main__":
    key = jax.random.PRNGKey(0)
    kx, kp = jax.random.split(key)

    B, T = 2, 8
    input_dim, prenet_dim, n_layers = 32, 32, 2

    x = jax.random.normal(kx, (B, T, input_dim), dtype=jnp.float32)
    raw_params = init_prenet_params(kp, input_dim, prenet_dim, n_layers)
    layers = prepare_prenet_params(raw_params)       # pad + fold 2x + bf16, once

    use_hw_prng = _hw_prng_supported()
    fwd = jax.jit(functools.partial(prenet_forward, out_dim=prenet_dim,
                                    use_hw_prng=use_hw_prng))

    seed = jnp.int32(1234)
    out = jax.block_until_ready(fwd(x, layers, seed))

    assert out.shape == (B, T, prenet_dim), out.shape
    assert out.dtype == jnp.float32
    assert bool(jnp.all(jnp.isfinite(out)))
    assert bool(jnp.all(out >= 0.0))                  # post-ReLU (+ dropout zeros)
    assert bool(jnp.any(out > 0.0))
    zero_frac = float(jnp.mean(out == 0.0))
    assert zero_frac > 0.25, zero_frac                # ~p_dropout plus ReLU zeros

    # Same seed -> identical output; different seed -> different dropout masks.
    out_same = jax.block_until_ready(fwd(x, layers, seed))
    assert bool(jnp.array_equal(out, out_same))
    out_diff = jax.block_until_ready(fwd(x, layers, jnp.int32(4321)))
    assert not bool(jnp.array_equal(out, out_diff))

    if not use_hw_prng:
        # Hash-dropout fallback path: validate against a pure-JAX replica.
        seeds = seed * n_layers + jnp.arange(n_layers, dtype=jnp.int32)
        ref = prenet_reference_hash(x, layers, seeds, prenet_dim)
        assert bool(jnp.allclose(out, ref, rtol=1e-2, atol=1e-2)), \
            float(jnp.max(jnp.abs(out - ref)))

    print("KERNEL_OK")
</pallas_src>

<mosaic_0001>
module attributes {stable_mosaic.version = 11 : i64} {
  func.func @kernel(%arg0: i32, %arg1: memref<2xi32, #tpu.memory_space<smem>>, %arg2: memref<16x32xbf16, #tpu.memory_space<vmem>>, %arg3: memref<32x128xbf16, #tpu.memory_space<vmem>>, %arg4: memref<1x128xf32, #tpu.memory_space<vmem>>, %arg5: memref<128x128xbf16, #tpu.memory_space<vmem>>, %arg6: memref<1x128xf32, #tpu.memory_space<vmem>>, %arg7: memref<16x128xf32, #tpu.memory_space<vmem>>) attributes {dimension_semantics = [#tpu.dimension_semantics<parallel>], iteration_bounds = array<i64: 1>, scalar_prefetch = 1 : i64, scratch_operands = 0 : i64, tpu.core_type = #tpu.core_type<tc>, window_params = [{transform_indices = @transform_0, window_bounds = array<i64: 16, 32>}, {pipeline_mode = #tpu.pipeline_mode<synchronous>, transform_indices = @transform_1, window_bounds = array<i64: 32, 128>}, {pipeline_mode = #tpu.pipeline_mode<synchronous>, transform_indices = @transform_2, window_bounds = array<i64: 1, 128>}, {pipeline_mode = #tpu.pipeline_mode<synchronous>, transform_indices = @transform_3, window_bounds = array<i64: 128, 128>}, {pipeline_mode = #tpu.pipeline_mode<synchronous>, transform_indices = @transform_4, window_bounds = array<i64: 1, 128>}, {transform_indices = @transform_5, window_bounds = array<i64: 16, 128>}]} {
    %c16_i32 = arith.constant 16 : i32
    %0 = arith.muli %arg0, %c16_i32 : i32
    %1 = tpu.iota {dimensions = array<i32: 0>} : vector<16x128xi32>
    %2 = vector.broadcast %0 : i32 to vector<16x128xi32>
    %3 = arith.addi %1, %2 : vector<16x128xi32>
    %4 = tpu.iota {dimensions = array<i32: 1>} : vector<16x128xi32>
    %c-1640531535_i32 = arith.constant -1640531535 : i32
    %5 = vector.broadcast %c-1640531535_i32 : i32 to vector<16x128xi32>
    %6 = arith.muli %3, %5 : vector<16x128xi32>
    %c-2048144777_i32 = arith.constant -2048144777 : i32
    %7 = vector.broadcast %c-2048144777_i32 : i32 to vector<16x128xi32>
    %8 = arith.muli %4, %7 : vector<16x128xi32>
    %9 = arith.addi %6, %8 : vector<16x128xi32>
    %c0 = arith.constant 0 : index
    %c0_0 = arith.constant 0 : index
    %10 = vector.load %arg2[%c0, %c0_0] : memref<16x32xbf16, #tpu.memory_space<vmem>>, vector<16x32xbf16>
    %c0_1 = arith.constant 0 : index
    %c0_2 = arith.constant 0 : index
    %11 = vector.load %arg3[%c0_1, %c0_2] : memref<32x128xbf16, #tpu.memory_space<vmem>>, vector<32x128xbf16>
    %cst = arith.constant dense<0.000000e+00> : vector<16x128xf32>
    %12 = tpu.matmul %10, %11, %cst {dimension_numbers = #tpu.dot_dimension_numbers<[1], [0], [0], [1], [0, 0, 1, 1], [], []>} : vector<16x32xbf16>, vector<32x128xbf16>, vector<16x128xf32> -> vector<16x128xf32>
    %c0_3 = arith.constant 0 : index
    %c0_4 = arith.constant 0 : index
    %13 = vector.load %arg4[%c0_3, %c0_4] : memref<1x128xf32, #tpu.memory_space<vmem>>, vector<1x128xf32>
    %14 = vector.broadcast %13 : vector<1x128xf32> to vector<16x128xf32>
    %15 = arith.addf %12, %14 : vector<16x128xf32>
    %cst_5 = arith.constant 0.000000e+00 : f32
    %16 = vector.broadcast %cst_5 : f32 to vector<16x128xf32>
    %17 = arith.maximumf %15, %16 : vector<16x128xf32>
    %c0_6 = arith.constant 0 : index
    %18 = memref.load %arg1[%c0_6] : memref<2xi32, #tpu.memory_space<smem>>
    %c668265263_i32 = arith.constant 668265263 : i32
    %19 = arith.muli %18, %c668265263_i32 : i32
    %20 = vector.broadcast %19 : i32 to vector<16x128xi32>
    %21 = arith.addi %9, %20 : vector<16x128xi32>
    %c16_i32_7 = arith.constant 16 : i32
    %22 = vector.broadcast %c16_i32_7 : i32 to vector<16x128xi32>
    %23 = arith.shrui %21, %22 : vector<16x128xi32>
    %24 = arith.xori %21, %23 : vector<16x128xi32>
    %c2146121005_i32 = arith.constant 2146121005 : i32
    %25 = vector.broadcast %c2146121005_i32 : i32 to vector<16x128xi32>
    %26 = arith.muli %24, %25 : vector<16x128xi32>
    %c15_i32 = arith.constant 15 : i32
    %27 = vector.broadcast %c15_i32 : i32 to vector<16x128xi32>
    %28 = arith.shrui %26, %27 : vector<16x128xi32>
    %29 = arith.xori %26, %28 : vector<16x128xi32>
    %c-2073254261_i32 = arith.constant -2073254261 : i32
    %30 = vector.broadcast %c-2073254261_i32 : i32 to vector<16x128xi32>
    %31 = arith.muli %29, %30 : vector<16x128xi32>
    %c16_i32_8 = arith.constant 16 : i32
    %32 = vector.broadcast %c16_i32_8 : i32 to vector<16x128xi32>
    %33 = arith.shrui %31, %32 : vector<16x128xi32>
    %34 = arith.xori %31, %33 : vector<16x128xi32>
    %c8_i32 = arith.constant 8 : i32
    %35 = vector.broadcast %c8_i32 : i32 to vector<16x128xi32>
    %36 = arith.shrui %34, %35 : vector<16x128xi32>
    %c8388608_i32 = arith.constant 8388608 : i32
    %37 = vector.broadcast %c8388608_i32 : i32 to vector<16x128xi32>
    %38 = arith.cmpi ult, %36, %37 : vector<16x128xi32>
    %cst_9 = arith.constant 0.000000e+00 : f32
    %39 = vector.broadcast %cst_9 : f32 to vector<16x128xf32>
    %40 = arith.select %38, %17, %39 : vector<16x128xi1>, vector<16x128xf32>
    %41 = arith.truncf %40 : vector<16x128xf32> to vector<16x128xbf16>
    %c0_10 = arith.constant 0 : index
    %c0_11 = arith.constant 0 : index
    %42 = vector.load %arg5[%c0_10, %c0_11] : memref<128x128xbf16, #tpu.memory_space<vmem>>, vector<128x128xbf16>
    %cst_12 = arith.constant dense<0.000000e+00> : vector<16x128xf32>
    %43 = tpu.matmul %41, %42, %cst_12 {dimension_numbers = #tpu.dot_dimension_numbers<[1], [0], [0], [1], [0, 0, 1, 1], [], []>} : vector<16x128xbf16>, vector<128x128xbf16>, vector<16x128xf32> -> vector<16x128xf32>
    %c0_13 = arith.constant 0 : index
    %c0_14 = arith.constant 0 : index
    %44 = vector.load %arg6[%c0_13, %c0_14] : memref<1x128xf32, #tpu.memory_space<vmem>>, vector<1x128xf32>
    %45 = vector.broadcast %44 : vector<1x128xf32> to vector<16x128xf32>
    %46 = arith.addf %43, %45 : vector<16x128xf32>
    %cst_15 = arith.constant 0.000000e+00 : f32
    %47 = vector.broadcast %cst_15 : f32 to vector<16x128xf32>
    %48 = arith.maximumf %46, %47 : vector<16x128xf32>
    %c1 = arith.constant 1 : index
    %49 = memref.load %arg1[%c1] : memref<2xi32, #tpu.memory_space<smem>>
    %c668265263_i32_16 = arith.constant 668265263 : i32
    %50 = arith.muli %49, %c668265263_i32_16 : i32
    %51 = vector.broadcast %50 : i32 to vector<16x128xi32>
    %52 = arith.addi %9, %51 : vector<16x128xi32>
    %c16_i32_17 = arith.constant 16 : i32
    %53 = vector.broadcast %c16_i32_17 : i32 to vector<16x128xi32>
    %54 = arith.shrui %52, %53 : vector<16x128xi32>
    %55 = arith.xori %52, %54 : vector<16x128xi32>
    %c2146121005_i32_18 = arith.constant 2146121005 : i32
    %56 = vector.broadcast %c2146121005_i32_18 : i32 to vector<16x128xi32>
    %57 = arith.muli %55, %56 : vector<16x128xi32>
    %c15_i32_19 = arith.constant 15 : i32
    %58 = vector.broadcast %c15_i32_19 : i32 to vector<16x128xi32>
    %59 = arith.shrui %57, %58 : vector<16x128xi32>
    %60 = arith.xori %57, %59 : vector<16x128xi32>
    %c-2073254261_i32_20 = arith.constant -2073254261 : i32
    %61 = vector.broadcast %c-2073254261_i32_20 : i32 to vector<16x128xi32>
    %62 = arith.muli %60, %61 : vector<16x128xi32>
    %c16_i32_21 = arith.constant 16 : i32
    %63 = vector.broadcast %c16_i32_21 : i32 to vector<16x128xi32>
    %64 = arith.shrui %62, %63 : vector<16x128xi32>
    %65 = arith.xori %62, %64 : vector<16x128xi32>
    %c8_i32_22 = arith.constant 8 : i32
    %66 = vector.broadcast %c8_i32_22 : i32 to vector<16x128xi32>
    %67 = arith.shrui %65, %66 : vector<16x128xi32>
    %c8388608_i32_23 = arith.constant 8388608 : i32
    %68 = vector.broadcast %c8388608_i32_23 : i32 to vector<16x128xi32>
    %69 = arith.cmpi ult, %67, %68 : vector<16x128xi32>
    %cst_24 = arith.constant 0.000000e+00 : f32
    %70 = vector.broadcast %cst_24 : f32 to vector<16x128xf32>
    %71 = arith.select %69, %48, %70 : vector<16x128xi1>, vector<16x128xf32>
    %c0_25 = arith.constant 0 : index
    %c0_26 = arith.constant 0 : index
    %72 = vector.load %arg7[%c0_25, %c0_26] : memref<16x128xf32, #tpu.memory_space<vmem>>, vector<16x128xf32>
    tpu.vector_store %arg7[%c0_25, %c0_26], %71 {strides = array<i32>} : memref<16x128xf32, #tpu.memory_space<vmem>>, vector<16x128xf32>,
    return
  }
  func.func @transform_0(%arg0: i32, %arg1: memref<2xi32, #tpu.memory_space<smem>>) -> (i32, i32) {
    %c0_i32 = arith.constant 0 : i32
    %c0_i32_0 = arith.constant 0 : i32
    return %arg0, %c0_i32 : i32, i32
  }
  func.func @transform_1(%arg0: i32, %arg1: memref<2xi32, #tpu.memory_space<smem>>) -> (i32, i32) {
    %c0_i32 = arith.constant 0 : i32
    %c0_i32_0 = arith.constant 0 : i32
    %c0_i32_1 = arith.constant 0 : i32
    return %c0_i32, %c0_i32_0 : i32, i32
  }
  func.func @transform_2(%arg0: i32, %arg1: memref<2xi32, #tpu.memory_space<smem>>) -> (i32, i32) {
    %c0_i32 = arith.constant 0 : i32
    %c0_i32_0 = arith.constant 0 : i32
    %c0_i32_1 = arith.constant 0 : i32
    return %c0_i32, %c0_i32_0 : i32, i32
  }
  func.func @transform_3(%arg0: i32, %arg1: memref<2xi32, #tpu.memory_space<smem>>) -> (i32, i32) {
    %c0_i32 = arith.constant 0 : i32
    %c0_i32_0 = arith.constant 0 : i32
    %c0_i32_1 = arith.constant 0 : i32
    return %c0_i32, %c0_i32_0 : i32, i32
  }
  func.func @transform_4(%arg0: i32, %arg1: memref<2xi32, #tpu.memory_space<smem>>) -> (i32, i32) {
    %c0_i32 = arith.constant 0 : i32
    %c0_i32_0 = arith.constant 0 : i32
    %c0_i32_1 = arith.constant 0 : i32
    return %c0_i32, %c0_i32_0 : i32, i32
  }
  func.func @transform_5(%arg0: i32, %arg1: memref<2xi32, #tpu.memory_space<smem>>) -> (i32, i32) {
    %c0_i32 = arith.constant 0 : i32
    %c0_i32_0 = arith.constant 0 : i32
    return %arg0, %c0_i32 : i32, i32
  }
}

</mosaic_0001>

<llo_original>
// kernel: prenet_forward.1
$region0: #{prenet_forward.1}
  #allocation0 [shape = 'u32[]', space=smem, size = 0x4, offset = 0x4, fixed_abs, tag = 'smem constant byte address 0x4 - core index']
  #allocation1 [shape = 'u32[72,128]{1,0:T(1,128)}', space=vmem, size = 0x9000, scoped, tag = 'internal scratch']
  #allocation2 [shape = 's32[1]{0}', space=sflag, size = 0x4, scoped, tag = 'scoped memory for prenet_forward.1']
  #allocation3 [shape = 'u8[512]{0}', space=smem, size = 0x200, scoped, tag = 'prefetched SMEM operand 0']
  %s0 = inlined_call_operand.vmem [shape: s32[2], index: 0, kind: input, shape index: {}]
  %s1 = inlined_call_operand.vmem [shape: bf16[16,32], index: 1, kind: input, shape index: {}]
  %s2 = inlined_call_operand.vmem [shape: bf16[32,128], index: 2, kind: input, shape index: {}]
  %s3 = inlined_call_operand.vmem [shape: f32[1,128], index: 3, kind: input, shape index: {}]
  %s4 = inlined_call_operand.hbm [shape: bf16[128,128], index: 4, kind: input, shape index: {}]
  %s5 = inlined_call_operand.vmem [shape: f32[1,128], index: 5, kind: input, shape index: {}]
  %s6 = inlined_call_operand.vmem [shape: f32[16,128], index: 6, kind: output, shape index: {}]
  %s7 = sld [smem:[#allocation0]]
  $region34: #{prenet_forward.1} parent=0
    _
  %s9 = ssub.s32 1, %s7
  %s10 = scalar_select 0, %s9, %s7
  %s12 = sshll.u32 %s0, 4
  %s13 = int_to_ptr.vmem [resolvable:$true] %s12
  %15 = dma.vmem_to_smem %s13, 16, [#allocation3], [#allocation2]
  %17 = dma.done [#allocation2], 16
  %18 = sfence
  $region1: #{prenet_forward.1} parent=0
    #allocation4 [shape = 'u8[32768]{0}', space=vmem, size = 0x8000, scoped, tag = 'input window, operand 4, single buffered']
    #allocation5 [shape = 's32[1]{0}', space=sflag, size = 0x4, scoped, tag = 'scoped memory for prenet_forward.1']
    %19 = vsyncpa [#allocation5], 0
    // Predicated region
    $region2: #{prenet_forward.1} parent=1 // pred_check
      _
    $region3: #{prenet_forward.1} parent=1 // pred_check_branch
      %21 = sbr.rel (0) target = $region5
    $region4: #{prenet_forward.1} parent=1 // pred_region
      _
    $region5: #{prenet_forward.1} parent=1 // pred_fallthru
      _
    // Predicated region
    $region6: #{prenet_forward.1} parent=1 // pred_check
      _
    $region7: #{prenet_forward.1} parent=1 // pred_check_branch
      %23 = sbr.rel (0) target = $region9
    $region8: #{prenet_forward.1} parent=1 // pred_region
      _
    $region9: #{prenet_forward.1} parent=1 // pred_fallthru
      _
    // Predicated region
    $region10: #{prenet_forward.1} parent=1 // pred_check
      _
    $region11: #{prenet_forward.1} parent=1 // pred_check_branch
      %25 = sbr.rel (0) target = $region13
    $region12: #{prenet_forward.1} parent=1 // pred_region
      _
    $region13: #{prenet_forward.1} parent=1 // pred_fallthru
      _
    // Predicated region
    $region14: #{prenet_forward.1} parent=1 // pred_check
      _
    $region15: #{prenet_forward.1} parent=1 // pred_check_branch
      %27 = sbr.rel (0) target = $region17
    $region16: #{prenet_forward.1} parent=1 // pred_region
      %29 = vsyncadd [#allocation5], 0
      %s30 = sshll.u32 %s4, 4
      %s31 = int_to_ptr.hbm [resolvable:$true] %s30
      %s32 = sshll.u32 [#allocation4], 4
      %s33 = int_to_ptr.vmem [resolvable:$true] %s32
      %38 = dma.hbm_to_vmem [thread:$0]  %s31, 1024, %s33, [#allocation5], 64, 64, 4
    $region17: #{prenet_forward.1} parent=1 // pred_fallthru
      _
    // Predicated region
    $region18: #{prenet_forward.1} parent=1 // pred_check
      _
    $region19: #{prenet_forward.1} parent=1 // pred_check_branch
      %40 = sbr.rel (0) target = $region21
    $region20: #{prenet_forward.1} parent=1 // pred_region
      _
    $region21: #{prenet_forward.1} parent=1 // pred_fallthru
      _
    // Predicated region
    $region22: #{prenet_forward.1} parent=1 // pred_check
      _
    $region23: #{prenet_forward.1} parent=1 // pred_check_branch
      %42 = sbr.rel (0) target = $region25
    $region24: #{prenet_forward.1} parent=1 // pred_region
      %44 = dma.done [#allocation5], 1024
    $region25: #{prenet_forward.1} parent=1 // pred_fallthru
      _
    %s46 = smul.u32 0, 16
    %v47 = vlaneseq
    %v48 = vshrl.u32 %v47, 7
    %v49 = vadd.s32 %v48, 8
    %v50 = vstv %s46
    %v51 = vadd.s32 %v48, %v50
    %v52 = vadd.s32 %v49, %v50
    %v53 = vlaneseq
    %v54 = vand.u32 %v53, 127
    %v55 = vmul.u32 %v51, 2654435761
    %v56 = vmul.u32 %v52, 2654435761
    %v57 = vmul.u32 %v54, 2246822519
    %v58 = vadd.s32 %v55, %v57
    %v59 = vadd.s32 %v56, %v57
    %v60 = vld [vmem:[%s1] sm:$0xf]
    %v61 = vld [vmem:[%s1 + $0x4] sm:$0xf]
    %v62 = vld [vmem:[%s2] sm:$0xf]
    %v63 = vld [vmem:[%s2 + $0x4] sm:$0xf]
    %v64 = vld [vmem:[%s2 + $0x8] sm:$0xf]
    %v65 = vld [vmem:[%s2 + $0xc] sm:$0xf]
    %v66 = vld [vmem:[%s3] sm:$0x1]
    %v68 = vperm.slane %v66, 0
    %v72 = vunpack.c.l.b16 %v60
    %v73 = vunpack.c.l.b16 %v61
    %v74 = vpack.c.b16 %v73, %v72
    %v79 = vunpack.c.l.b16 %v62
    %v80 = vunpack.c.l.b16 %v63
    %v81 = vunpack.c.l.b16 %v64
    %v82 = vunpack.c.l.b16 %v65
    %v83 = vpack.c.b16 %v80, %v79
    %v84 = vpack.c.b16 %v82, %v81
    %vm87 = vcmask 261120
    %v89 = vsel %vm87, %v74, 0
    %91 = vmatpush.bf16.msra.mxu0 0
    %92 = vmatpush.bf16.msra.mxu0 0
    %93 = vmatpush.bf16.msra.mxu0 0
    %94 = vmatpush.bf16.msra.mxu0 0
    %95 = vmatpush.bf16.msra.mxu0 0
    %96 = vmatpush.bf16.msra.mxu0 0
    %97 = vmatpush.bf16.msra.mxu0 %v84
    %98 = vmatpush.bf16.msra.mxu0 %v83
    %99 = vmatmul.bf16.gmra.mxu0 %v89
    %v100 = vpop.f32.mrf.mxu0
    %v101 = vadd.f32 %v68, %v100
    %v102 = vpop.f32.mrf.mxu0
    %v103 = vadd.f32 %v68, %v102
    %104 = vdwg.mxu0
    %v105 = vmax.f32 %v101, 0.0
    %v106 = vmax.f32 %v103, 0.0
    %s107 = sld [smem:[#allocation3]]
    %s108 = smul.u32 %s107, 668265263
    %v109 = vstv %s108
    %v110 = vadd.s32 %v58, %v109
    %v111 = vadd.s32 %v59, %v109
    %v112 = vshrl.u32 %v110, 16
    %v113 = vshrl.u32 %v111, 16
    %v114 = vxor.u32 %v110, %v112
    %v115 = vxor.u32 %v111, %v113
    %v116 = vmul.u32 %v114, 2146121005
    %v117 = vmul.u32 %v115, 2146121005
    %v118 = vshrl.u32 %v116, 15
    %v119 = vshrl.u32 %v117, 15
    %v120 = vxor.u32 %v116, %v118
    %v121 = vxor.u32 %v117, %v119
    %v122 = vmul.u32 %v120, 2221713035
    %v123 = vmul.u32 %v121, 2221713035
    %v124 = vshrl.u32 %v122, 16
    %v125 = vshrl.u32 %v123, 16
    %v126 = vxor.u32 %v122, %v124
    %v127 = vxor.u32 %v123, %v125
    %v128 = vshrl.u32 %v126, 8
    %v129 = vshrl.u32 %v127, 8
    %v130 = vadd.s32 %v128, 2147483648
    %vm132 = vcmp.lt.s32.totalorder %v130, 2155872256
    %v133 = vadd.s32 %v129, 2147483648
    %vm135 = vcmp.lt.s32.totalorder %v133, 2155872256
    %v136 = vsel %vm132, %v105, 0.0
    %v137 = vsel %vm135, %v106, 0.0
    %v138 = vpack.c.bf16 %v137, %v136
    %v139 = vld [vmem:[#allocation4] sm:$0xf]
    %v140 = vld [vmem:[#allocation4 + $0x4] sm:$0xf]
    %v141 = vld [vmem:[#allocation4 + $0x8] sm:$0xf]
    %v142 = vld [vmem:[#allocation4 + $0xc] sm:$0xf]
    %v143 = vld [vmem:[#allocation4 + $0x10] sm:$0xf]
    %v144 = vld [vmem:[#allocation4 + $0x14] sm:$0xf]
    %v145 = vld [vmem:[#allocation4 + $0x18] sm:$0xf]
    %v146 = vld [vmem:[#allocation4 + $0x1c] sm:$0xf]
    %v147 = vld [vmem:[#allocation4 + $0x20] sm:$0xf]
    %v148 = vld [vmem:[#allocation4 + $0x24] sm:$0xf]
    %v149 = vld [vmem:[#allocation4 + $0x28] sm:$0xf]
    %v150 = vld [vmem:[#allocation4 + $0x2c] sm:$0xf]
    %v151 = vld [vmem:[#allocation4 + $0x30] sm:$0xf]
    %v152 = vld [vmem:[#allocation4 + $0x34] sm:$0xf]
    %v153 = vld [vmem:[#allocation4 + $0x38] sm:$0xf]
    %v154 = vld [vmem:[#allocation4 + $0x3c] sm:$0xf]
    %v155 = vld [vmem:[%s5] sm:$0x1]
    %v157 = vperm.slane %v155, 0
    %v175 = vunpack.c.l.b16 %v139
    %v176 = vunpack.c.l.b16 %v140
    %v177 = vunpack.c.l.b16 %v141
    %v178 = vunpack.c.l.b16 %v142
    %v179 = vunpack.c.l.b16 %v143
    %v180 = vunpack.c.l.b16 %v144
    %v181 = vunpack.c.l.b16 %v145
    %v182 = vunpack.c.l.b16 %v146
    %v183 = vunpack.c.l.b16 %v147
    %v184 = vunpack.c.l.b16 %v148
    %v185 = vunpack.c.l.b16 %v149
    %v186 = vunpack.c.l.b16 %v150
    %v187 = vunpack.c.l.b16 %v151
    %v188 = vunpack.c.l.b16 %v152
    %v189 = vunpack.c.l.b16 %v153
    %v190 = vunpack.c.l.b16 %v154
    %v191 = vpack.c.b16 %v176, %v175
    %v192 = vpack.c.b16 %v178, %v177
    %v193 = vpack.c.b16 %v180, %v179
    %v194 = vpack.c.b16 %v182, %v181
    %v195 = vpack.c.b16 %v184, %v183
    %v196 = vpack.c.b16 %v186, %v185
    %v197 = vpack.c.b16 %v188, %v187
    %v198 = vpack.c.b16 %v190, %v189
    %207 = vmatpush.bf16.msra.mxu0 %v198
    %208 = vmatpush.bf16.msra.mxu0 %v197
    %209 = vmatpush.bf16.msra.mxu0 %v196
    %210 = vmatpush.bf16.msra.mxu0 %v195
    %211 = vmatpush.bf16.msra.mxu0 %v194
    %212 = vmatpush.bf16.msra.mxu0 %v193
    %213 = vmatpush.bf16.msra.mxu0 %v192
    %214 = vmatpush.bf16.msra.mxu0 %v191
    %215 = vmatmul.bf16.gmra.mxu0 %v138
    %v216 = vpop.f32.mrf.mxu0
    %v217 = vadd.f32 %v157, %v216
    %v218 = vpop.f32.mrf.mxu0
    %v219 = vadd.f32 %v157, %v218
    %220 = vdwg.mxu0
    %v221 = vmax.f32 %v217, 0.0
    %v222 = vmax.f32 %v219, 0.0
    %s223 = sld [smem:[#allocation3 + $0x1]]
    %s224 = smul.u32 %s223, 668265263
    %v225 = vstv %s224
    %v226 = vadd.s32 %v58, %v225
    %v227 = vadd.s32 %v59, %v225
    %v228 = vshrl.u32 %v226, 16
    %v229 = vshrl.u32 %v227, 16
    %v230 = vxor.u32 %v226, %v228
    %v231 = vxor.u32 %v227, %v229
    %v232 = vmul.u32 %v230, 2146121005
    %v233 = vmul.u32 %v231, 2146121005
    %v234 = vshrl.u32 %v232, 15
    %v235 = vshrl.u32 %v233, 15
    %v236 = vxor.u32 %v232, %v234
    %v237 = vxor.u32 %v233, %v235
    %v238 = vmul.u32 %v236, 2221713035
    %v239 = vmul.u32 %v237, 2221713035
    %v240 = vshrl.u32 %v238, 16
    %v241 = vshrl.u32 %v239, 16
    %v242 = vxor.u32 %v238, %v240
    %v243 = vxor.u32 %v239, %v241
    %v244 = vshrl.u32 %v242, 8
    %v245 = vshrl.u32 %v243, 8
    %v246 = vadd.s32 %v244, 2147483648
    %vm248 = vcmp.lt.s32.totalorder %v246, 2155872256
    %v249 = vadd.s32 %v245, 2147483648
    %vm251 = vcmp.lt.s32.totalorder %v249, 2155872256
    %v252 = vsel %vm248, %v221, 0.0
    %v253 = vsel %vm251, %v222, 0.0
    %254 = vst [vmem:[%s6] sm:$0xff] %v252
    %255 = vst [vmem:[%s6 + $0x8] sm:$0xff] %v253
    // Predicated region
    $region26: #{prenet_forward.1} parent=1 // pred_check
      _
    $region27: #{prenet_forward.1} parent=1 // pred_check_branch
      %257 = sbr.rel (0) target = $region29
    $region28: #{prenet_forward.1} parent=1 // pred_region
      _
    $region29: #{prenet_forward.1} parent=1 // pred_fallthru
      _
    // Predicated region
    $region30: #{prenet_forward.1} parent=1 // pred_check
      _
    $region31: #{prenet_forward.1} parent=1 // pred_check_branch
      %259 = sbr.rel (0) target = $region33
    $region32: #{prenet_forward.1} parent=1 // pred_region
      _
    $region33: #{prenet_forward.1} parent=1 // pred_fallthru
      _
    %260 = vsyncpa [#allocation5], 1

</llo_original>
